<compile_context>
chip_gen: v7x
topology: tpu7x:2x2x1
jax: 0.10.0
libtpu: 0.0.40
codegen_flags: <defaults>
</compile_context>

<pallas_src>
import jax
import jax.numpy as jnp
import numpy as np
from jax.experimental import pallas as pl
from jax.experimental.pallas import tpu as pltpu

LEAKY_ALPHA = 0.2            # negative slope of LeakyReLU (the `alpha` ctor arg)
LANE = 128
TM_MAX = 512                 # row (i) tile upper bound
TN_MAX = 1024                # col (j, reduction) tile upper bound
VMEM_LIMIT = 32 * 1024 * 1024   # scoped-VMEM budget; safe on v7x (64 MiB physical) and v5e/v6e


def _round_up(x, m):
    return ((x + m - 1) // m) * m


def _largest_tile(n_pad, cap):
    """Largest multiple of 128 that divides n_pad and is <= cap (always >= 128)."""
    best = LANE
    t = LANE
    limit = min(cap, n_pad)
    while t <= limit:
        if n_pad % t == 0:
            best = t
        t += LANE
    return best


def _pick_tiles(n):
    """Pad N only to a multiple of 128; tiles are divisors of n_pad (no padding blow-up)."""
    n_pad = _round_up(n, LANE)
    tn = _largest_tile(n_pad, TN_MAX)
    # keep >= 2 row blocks when possible so the "parallel" i axis feeds both v7x TensorCores
    tm_cap = TM_MAX if n_pad <= LANE else min(TM_MAX, n_pad // 2)
    tm = _largest_tile(n_pad, tm_cap)
    return n_pad, tm, tn


def pack_adjacency(adj, n_pad):
    """(N, N) adjacency (any dtype) -> (n_pad, n_pad) int8 mask. Cache this across calls."""
    n = adj.shape[0]
    if adj.dtype == jnp.int8 or adj.dtype == jnp.bool_:
        adj_i8 = adj.astype(jnp.int8)
    else:
        adj_i8 = (adj != 0).astype(jnp.int8)
    if n_pad == n:
        return adj_i8
    out = jnp.zeros((n_pad, n_pad), jnp.int8)
    return out.at[:n, :n].set(adj_i8)


def _precompute_kernel(xe_ref, we_ref, a2_ref, hext_ref, fg_ref):
    # h_ext = [x | 1] @ W_ext : columns [0:Fout) hold h, column Fout holds 1.0, rest 0.
    h_ext = jnp.dot(xe_ref[...], we_ref[...], preferred_element_type=jnp.float32)
    hext_ref[...] = h_ext
    # fg[:, 0] = h . a_src  (f_i),  fg[:, 1] = h . a_dst  (g_j)  -- one small MXU matmul.
    fg_ref[...] = jnp.dot(h_ext, a2_ref[...], preferred_element_type=jnp.float32)


def sp_graph_attention_layer(x, adj, W, a, *, leaky_alpha=LEAKY_ALPHA, tm=None, tn=None):
    N, fin = x.shape
    fout = W.shape[1]
    f_pad = _round_up(fout + 1, LANE)          # h columns + ones column, padded lane-dense
    n_pad, tm_auto, tn_auto = _pick_tiles(N)
    tm = tm_auto if tm is None else tm
    tn = tn_auto if tn is None else tn
    assert tm % LANE == 0 and tn % LANE == 0 and n_pad % tm == 0 and n_pad % tn == 0

    # ---- wrapper-side layout plumbing (O(N*F) work + one-off adjacency packing) ----------
    x_ext = jnp.zeros((n_pad, fin + 1), jnp.float32)
    x_ext = x_ext.at[:N, :fin].set(x.astype(jnp.float32))
    x_ext = x_ext.at[:N, fin].set(1.0)                       # ones column

    w_ext = jnp.zeros((fin + 1, f_pad), jnp.float32)
    w_ext = w_ext.at[:fin, :fout].set(W.astype(jnp.float32))
    w_ext = w_ext.at[fin, fout].set(1.0)                     # routes the ones column

    a2 = jnp.zeros((f_pad, 2), jnp.float32)                  # [a_src | a_dst], zero padded
    a2 = a2.at[:fout, 0].set(a[0, :fout].astype(jnp.float32))
    a2 = a2.at[:fout, 1].set(a[0, fout:].astype(jnp.float32))

    adj_mask = pack_adjacency(adj, n_pad)                    # int8, (n_pad, n_pad)

    # ---- stage 1: h_ext and per-node logits f/g ------------------------------------------
    h_ext, fg = pl.pallas_call(
        _precompute_kernel,
        out_shape=(jax.ShapeDtypeStruct((n_pad, f_pad), jnp.float32),
                   jax.ShapeDtypeStruct((n_pad, 2), jnp.float32)),
        grid_spec=pltpu.PrefetchScalarGridSpec(
            num_scalar_prefetch=0,
            grid=(n_pad // tm,),
            in_specs=[pl.BlockSpec((tm, fin + 1), lambda i: (i, 0)),
                      pl.BlockSpec((fin + 1, f_pad), lambda i: (0, 0)),
                      pl.BlockSpec((f_pad, 2), lambda i: (0, 0))],
            out_specs=[pl.BlockSpec((tm, f_pad), lambda i: (i, 0)),
                       pl.BlockSpec((tm, 2), lambda i: (i, 0))]),
        compiler_params=pltpu.CompilerParams(
            dimension_semantics=("parallel",),
            vmem_limit_bytes=VMEM_LIMIT),
    )(x_ext, w_ext, a2)

    f_col = fg[:, 0:1]                    # (Np, 1)  column layout for the i blocks
    g_row = jnp.transpose(fg[:, 1:2])     # (1, Np)  row layout for the j blocks (one relayout)

    # ---- stage 2: tiled masked attention + aggregation -----------------------------------
    def _attn_kernel(f_ref, g_ref, adj_ref, hext_ref, o_ref):
        j = pl.program_id(1)

        s = f_ref[...] + g_ref[...]                              # (tm, tn) broadcast add
        # -leakyrelu(s, slope=alpha) == min(-s, -alpha*s) for alpha < 1
        e = jnp.exp(jnp.minimum(-s, (-leaky_alpha) * s))
        e = jnp.where(adj_ref[...] != 0, e, 0.0)                 # cheap compare+select mask

        # h_ext is a VMEM-resident block: slice this j chunk in-kernel (no per-(i,j) HBM reload)
        row0 = pl.multiple_of(j * tn, LANE)
        h_j = hext_ref[pl.ds(row0, tn), :]                       # (tn, f_pad)
        contrib = jnp.dot(e, h_j, preferred_element_type=jnp.float32)

        # output block index (i, 0) is constant across j -> accumulate directly into o_ref
        @pl.when(j == 0)
        def _init():
            o_ref[...] = contrib

        @pl.when(j != 0)
        def _accumulate():
            o_ref[...] += contrib

        @pl.when(j == pl.num_programs(1) - 1)
        def _finalize():
            acc = o_ref[...]
            rowsum = acc[:, fout:fout + 1]                       # ones column of h_ext
            denom = jnp.where(rowsum > 0.0, rowsum, 1.0)         # guard padded / empty rows
            hp = acc * pl.reciprocal(denom, approx=False)        # exact: holds rtol=1e-4
            o_ref[...] = jnp.where(hp > 0.0, hp, jnp.exp(hp) - 1.0)   # ELU (alpha=1)

    out_ext = pl.pallas_call(
        _attn_kernel,
        out_shape=jax.ShapeDtypeStruct((n_pad, f_pad), jnp.float32),
        grid_spec=pltpu.PrefetchScalarGridSpec(
            num_scalar_prefetch=0,
            grid=(n_pad // tm, n_pad // tn),                     # reduction axis j last
            in_specs=[pl.BlockSpec((tm, 1), lambda i, j: (i, 0)),          # f_i
                      pl.BlockSpec((1, tn), lambda i, j: (0, j)),          # g_j
                      pl.BlockSpec((tm, tn), lambda i, j: (i, j)),         # adj mask (int8)
                      pl.BlockSpec((n_pad, f_pad), lambda i, j: (0, 0))],  # resident h_ext
            out_specs=pl.BlockSpec((tm, f_pad), lambda i, j: (i, 0))),
        compiler_params=pltpu.CompilerParams(
            dimension_semantics=("parallel", "arbitrary"),
            vmem_limit_bytes=VMEM_LIMIT),
    )(f_col, g_row, adj_mask, h_ext)

    return out_ext[:N, :fout]


def _xavier_normal(key, shape, gain):
    fan_out, fan_in = shape[0], shape[1]
    std = gain * np.sqrt(2.0 / (fan_in + fan_out))
    return std * jax.random.normal(key, shape, dtype=jnp.float32)


def _reference(x, adj, W, a, leaky_alpha=LEAKY_ALPHA):
    # pure-JAX dense reference of the PyTorch forward (eval mode), full-precision matmuls
    hp_prec = jax.lax.Precision.HIGHEST
    h = jnp.dot(x, W, precision=hp_prec)
    fout = W.shape[1]
    f = jnp.sum(h * a[:, :fout], axis=1, keepdims=True)
    g = jnp.sum(h * a[:, fout:], axis=1, keepdims=True)
    s = f + g.T
    e = jnp.exp(-jnp.where(s > 0, s, leaky_alpha * s))
    e = jnp.where(adj != 0, e, 0.0)
    rowsum = jnp.sum(e, axis=1, keepdims=True)
    hp = jnp.dot(e, h, precision=hp_prec) / rowsum
    return jnp.where(hp > 0, hp, jnp.exp(hp) - 1.0)


if __name__ == "__main__":
    key = jax.random.PRNGKey(0)
    k_x, k_adj, k_w, k_a = jax.random.split(key, 4)

    N, F_IN, F_OUT = 64, 16, 32
    x = jax.random.normal(k_x, (N, F_IN), dtype=jnp.float32)
    # random sparse adjacency with self-loops (every row has >= 1 edge, as the module assumes)
    adj = (jax.random.uniform(k_adj, (N, N)) < 0.25).astype(jnp.float32)
    adj = jnp.maximum(adj, jnp.eye(N, dtype=jnp.float32))

    W = _xavier_normal(k_w, (F_IN, F_OUT), gain=1.414)
    a = _xavier_normal(k_a, (1, 2 * F_OUT), gain=1.414)

    out = jax.block_until_ready(sp_graph_attention_layer(x, adj, W, a))
    ref = _reference(x, adj, W, a)
    assert out.shape == (N, F_OUT)
    assert bool(jnp.all(jnp.isfinite(out)))
    np.testing.assert_allclose(np.asarray(out), np.asarray(ref), rtol=1e-4, atol=2e-5)

    # Larger check: exercises padding (N=300 -> n_pad=384), multiple row blocks, default tiles.
    N2 = 300
    k2x, k2adj = jax.random.split(jax.random.PRNGKey(1))
    x2 = jax.random.normal(k2x, (N2, F_IN), dtype=jnp.float32)
    adj2 = (jax.random.uniform(k2adj, (N2, N2)) < 0.05).astype(jnp.float32)
    adj2 = jnp.maximum(adj2, jnp.eye(N2, dtype=jnp.float32))
    adj2_packed = (adj2 != 0).astype(jnp.int8)     # pre-packed int8 fast path (cacheable)
    ref2 = _reference(x2, adj2, W, a)

    out2 = jax.block_until_ready(sp_graph_attention_layer(x2, adj2_packed, W, a))
    assert bool(jnp.all(jnp.isfinite(out2)))
    np.testing.assert_allclose(np.asarray(out2), np.asarray(ref2), rtol=1e-4, atol=2e-5)

    # Forced small tiles: exercises the multi-j-block accumulation path (grid 3x3).
    out3 = jax.block_until_ready(sp_graph_attention_layer(x2, adj2_packed, W, a, tm=128, tn=128))
    np.testing.assert_allclose(np.asarray(out3), np.asarray(ref2), rtol=1e-4, atol=2e-5)

    print("KERNEL_OK")
</pallas_src>

<mosaic_0001>
module attributes {stable_mosaic.version = 11 : i64} {
  func.func @_precompute_kernel(%arg0: i32, %arg1: memref<128x17xf32, #tpu.memory_space<vmem>>, %arg2: memref<17x128xf32, #tpu.memory_space<vmem>>, %arg3: memref<128x2xf32, #tpu.memory_space<vmem>>, %arg4: memref<128x128xf32, #tpu.memory_space<vmem>>, %arg5: memref<128x2xf32, #tpu.memory_space<vmem>>) attributes {dimension_semantics = [#tpu.dimension_semantics<parallel>], iteration_bounds = array<i64: 1>, scalar_prefetch = 0 : i64, scratch_operands = 0 : i64, tpu.core_type = #tpu.core_type<tc>, window_params = [{transform_indices = @transform_0, window_bounds = array<i64: 128, 17>}, {pipeline_mode = #tpu.pipeline_mode<synchronous>, transform_indices = @transform_1, window_bounds = array<i64: 17, 128>}, {pipeline_mode = #tpu.pipeline_mode<synchronous>, transform_indices = @transform_2, window_bounds = array<i64: 128, 2>}, {transform_indices = @transform_3, window_bounds = array<i64: 128, 128>}, {transform_indices = @transform_4, window_bounds = array<i64: 128, 2>}]} {
    %c0 = arith.constant 0 : index
    %c0_0 = arith.constant 0 : index
    %0 = vector.load %arg1[%c0, %c0_0] : memref<128x17xf32, #tpu.memory_space<vmem>>, vector<128x17xf32>
    %c0_1 = arith.constant 0 : index
    %c0_2 = arith.constant 0 : index
    %1 = vector.load %arg2[%c0_1, %c0_2] : memref<17x128xf32, #tpu.memory_space<vmem>>, vector<17x128xf32>
    %cst = arith.constant dense<0.000000e+00> : vector<128x128xf32>
    %2 = tpu.matmul %0, %1, %cst {dimension_numbers = #tpu.dot_dimension_numbers<[1], [0], [0], [1], [0, 0, 1, 1], [], []>} : vector<128x17xf32>, vector<17x128xf32>, vector<128x128xf32> -> vector<128x128xf32>
    %c0_3 = arith.constant 0 : index
    %c0_4 = arith.constant 0 : index
    %3 = vector.load %arg4[%c0_3, %c0_4] : memref<128x128xf32, #tpu.memory_space<vmem>>, vector<128x128xf32>
    tpu.vector_store %arg4[%c0_3, %c0_4], %2 {strides = array<i32>} : memref<128x128xf32, #tpu.memory_space<vmem>>, vector<128x128xf32>,
    %c0_5 = arith.constant 0 : index
    %c0_6 = arith.constant 0 : index
    %4 = vector.load %arg3[%c0_5, %c0_6] : memref<128x2xf32, #tpu.memory_space<vmem>>, vector<128x2xf32>
    %cst_7 = arith.constant dense<0.000000e+00> : vector<128x2xf32>
    %5 = tpu.matmul %2, %4, %cst_7 {dimension_numbers = #tpu.dot_dimension_numbers<[1], [0], [0], [1], [0, 0, 1, 1], [], []>} : vector<128x128xf32>, vector<128x2xf32>, vector<128x2xf32> -> vector<128x2xf32>
    %c0_8 = arith.constant 0 : index
    %c0_9 = arith.constant 0 : index
    %6 = vector.load %arg5[%c0_8, %c0_9] : memref<128x2xf32, #tpu.memory_space<vmem>>, vector<128x2xf32>
    tpu.vector_store %arg5[%c0_8, %c0_9], %5 {strides = array<i32>} : memref<128x2xf32, #tpu.memory_space<vmem>>, vector<128x2xf32>,
    return
  }
  func.func @transform_0(%arg0: i32) -> (i32, i32) {
    %c0_i32 = arith.constant 0 : i32
    %c0_i32_0 = arith.constant 0 : i32
    return %arg0, %c0_i32 : i32, i32
  }
  func.func @transform_1(%arg0: i32) -> (i32, i32) {
    %c0_i32 = arith.constant 0 : i32
    %c0_i32_0 = arith.constant 0 : i32
    %c0_i32_1 = arith.constant 0 : i32
    return %c0_i32, %c0_i32_0 : i32, i32
  }
  func.func @transform_2(%arg0: i32) -> (i32, i32) {
    %c0_i32 = arith.constant 0 : i32
    %c0_i32_0 = arith.constant 0 : i32
    %c0_i32_1 = arith.constant 0 : i32
    return %c0_i32, %c0_i32_0 : i32, i32
  }
  func.func @transform_3(%arg0: i32) -> (i32, i32) {
    %c0_i32 = arith.constant 0 : i32
    %c0_i32_0 = arith.constant 0 : i32
    return %arg0, %c0_i32 : i32, i32
  }
  func.func @transform_4(%arg0: i32) -> (i32, i32) {
    %c0_i32 = arith.constant 0 : i32
    %c0_i32_0 = arith.constant 0 : i32
    return %arg0, %c0_i32 : i32, i32
  }
}

</mosaic_0001>

<llo_original>
// kernel: tpu_custom_call.1
$region0: #{tpu_custom_call.1}
  #allocation0 [shape = 'u32[]', space=smem, size = 0x4, offset = 0x4, fixed_abs, tag = 'smem constant byte address 0x4 - core index']
  #allocation1 [shape = 'u32[144,128]{1,0:T(1,128)}', space=vmem, size = 0x12000, scoped, tag = 'internal scratch']
  %s0 = inlined_call_operand.vmem [shape: f32[128,17], index: 0, kind: input, shape index: {}]
  %s1 = inlined_call_operand.vmem [shape: f32[17,128], index: 1, kind: input, shape index: {}]
  %s2 = inlined_call_operand.vmem [shape: f32[128,2], index: 2, kind: input, shape index: {}]
  %s3 = inlined_call_operand.hbm [shape: f32[128,128], index: 3, kind: output, shape index: {0}]
  %s4 = inlined_call_operand.vmem [shape: f32[128,2], index: 4, kind: output, shape index: {1}]
  %5 = xla_tuple %s3, %s4
  %s6 = sld [smem:[#allocation0]]
  $region30: #{tpu_custom_call.1} parent=0
    _
  %s8 = ssub.s32 1, %s6
  %s9 = scalar_select 0, %s8, %s6
  $region1: #{tpu_custom_call.1} parent=0
    #allocation2 [shape = 'u8[65536]{0}', space=vmem, size = 0x10000, scoped, tag = 'output window, operand 0, single buffered']
    #allocation3 [shape = 's32[1]{0}', space=sflag, size = 0x4, scoped, tag = 'scoped memory for tpu_custom_call.1']
    %10 = vsyncpa [#allocation3], 0
    // Predicated region
    $region2: #{tpu_custom_call.1} parent=1 // pred_check
      _
    $region3: #{tpu_custom_call.1} parent=1 // pred_check_branch
      %12 = sbr.rel (0) target = $region5
    $region4: #{tpu_custom_call.1} parent=1 // pred_region
      _
    $region5: #{tpu_custom_call.1} parent=1 // pred_fallthru
      _
    // Predicated region
    $region6: #{tpu_custom_call.1} parent=1 // pred_check
      _
    $region7: #{tpu_custom_call.1} parent=1 // pred_check_branch
      %14 = sbr.rel (0) target = $region9
    $region8: #{tpu_custom_call.1} parent=1 // pred_region
      _
    $region9: #{tpu_custom_call.1} parent=1 // pred_fallthru
      _
    // Predicated region
    $region10: #{tpu_custom_call.1} parent=1 // pred_check
      _
    $region11: #{tpu_custom_call.1} parent=1 // pred_check_branch
      %16 = sbr.rel (0) target = $region13
    $region12: #{tpu_custom_call.1} parent=1 // pred_region
      _
    $region13: #{tpu_custom_call.1} parent=1 // pred_fallthru
      _
    %v17 = vld [vmem:[%s0] sm:$0xff]
    %v18 = vld [vmem:[%s0 + $0x8] sm:$0xff]
    %v19 = vld [vmem:[%s0 + $0x10] sm:$0xff]
    %v20 = vld [vmem:[%s0 + $0x18] sm:$0xff]
    %v21 = vld [vmem:[%s0 + $0x20] sm:$0xff]
    %v22 = vld [vmem:[%s0 + $0x28] sm:$0xff]
    %v23 = vld [vmem:[%s0 + $0x30] sm:$0xff]
    %v24 = vld [vmem:[%s0 + $0x38] sm:$0xff]
    %v25 = vld [vmem:[%s0 + $0x40] sm:$0xff]
    %v26 = vld [vmem:[%s0 + $0x48] sm:$0xff]
    %v27 = vld [vmem:[%s0 + $0x50] sm:$0xff]
    %v28 = vld [vmem:[%s0 + $0x58] sm:$0xff]
    %v29 = vld [vmem:[%s0 + $0x60] sm:$0xff]
    %v30 = vld [vmem:[%s0 + $0x68] sm:$0xff]
    %v31 = vld [vmem:[%s0 + $0x70] sm:$0xff]
    %v32 = vld [vmem:[%s0 + $0x78] sm:$0xff]
    %v33 = vld [vmem:[%s1] sm:$0xff]
    %v34 = vld [vmem:[%s1 + $0x8] sm:$0xff]
    %v35 = vld [vmem:[%s1 + $0x10] sm:$0x1]
    %vm36 = vcmask 138240
    %v38 = vsel %vm36, %v17, 0
    %v41 = vsel %vm36, %v18, 0
    %v44 = vsel %vm36, %v19, 0
    %v47 = vsel %vm36, %v20, 0
    %v50 = vsel %vm36, %v21, 0
    %v53 = vsel %vm36, %v22, 0
    %v56 = vsel %vm36, %v23, 0
    %v59 = vsel %vm36, %v24, 0
    %v62 = vsel %vm36, %v25, 0
    %v65 = vsel %vm36, %v26, 0
    %v68 = vsel %vm36, %v27, 0
    %v71 = vsel %vm36, %v28, 0
    %v74 = vsel %vm36, %v29, 0
    %v77 = vsel %vm36, %v30, 0
    %v80 = vsel %vm36, %v31, 0
    %v83 = vsel %vm36, %v32, 0
    %vm85 = vcmask 1040384
    %v87 = vsel %vm85, %v35, 0
    %89 = vmatprep.subr.mxu0 0.0
    %90 = vmatpush1.msra.mxu0 %v33
    %91 = vmatprep.subr.mxu0 0.0
    %92 = vmatpush1.msra.mxu0 %v34
    %93 = vmatprep.subr.mxu0 0.0
    %94 = vmatpush1.msra.mxu0 %v87
    %95 = vmatprep.subr.mxu0 0.0
    %96 = vmatpush1.msra.mxu0 0.0
    %97 = vmatprep.subr.mxu0 0.0
    %98 = vmatpush1.msra.mxu0 0.0
    %99 = vmatprep.subr.mxu0 0.0
    %100 = vmatpush1.msra.mxu0 0.0
    %101 = vmatprep.subr.mxu0 0.0
    %102 = vmatpush1.msra.mxu0 0.0
    %103 = vmatprep.subr.mxu0 0.0
    %104 = vmatpush1.msra.mxu0 0.0
    %105 = vmatprep.subr.mxu0 0.0
    %106 = vmatpush1.msra.mxu0 0.0
    %107 = vmatprep.subr.mxu0 0.0
    %108 = vmatpush1.msra.mxu0 0.0
    %109 = vmatprep.subr.mxu0 0.0
    %110 = vmatpush1.msra.mxu0 0.0
    %111 = vmatprep.subr.mxu0 0.0
    %112 = vmatpush1.msra.mxu0 0.0
    %113 = vmatprep.subr.mxu0 0.0
    %114 = vmatpush1.msra.mxu0 0.0
    %115 = vmatprep.subr.mxu0 0.0
    %116 = vmatpush1.msra.mxu0 0.0
    %117 = vmatprep.subr.mxu0 0.0
    %118 = vmatpush1.msra.mxu0 0.0
    %119 = vmatprep.subr.mxu0 0.0
    %120 = vmatpush1.msra.mxu0 0.0
    %121 = vmatprep.subr.mxu0 0.0
    %122 = vmatpush1.msra.mxu0 0.0
    %123 = vmatprep.subr.mxu0 0.0
    %124 = vmatpush1.msra.mxu0 0.0
    %125 = vmatprep.subr.mxu0 0.0
    %126 = vmatpush1.msra.mxu0 0.0
    %127 = vmatprep.subr.mxu0 0.0
    %128 = vmatpush1.msra.mxu0 0.0
    %129 = vmatprep.subr.mxu0 0.0
    %130 = vmatpush1.msra.mxu0 0.0
    %131 = vmatprep.subr.mxu0 0.0
    %132 = vmatpush1.msra.mxu0 0.0
    %133 = vmatprep.subr.mxu0 0.0
    %134 = vmatpush1.msra.mxu0 0.0
    %135 = vmatprep.subr.mxu0 0.0
    %136 = vmatpush1.msra.mxu0 0.0
    %137 = vmatprep.subr.mxu0 0.0
    %138 = vmatpush1.msra.mxu0 0.0
    %139 = vmatprep.subr.mxu0 0.0
    %140 = vmatpush1.msra.mxu0 0.0
    %141 = vmatprep.subr.mxu0 0.0
    %142 = vmatpush1.msra.mxu0 0.0
    %143 = vmatprep.subr.mxu0 0.0
    %144 = vmatpush1.msra.mxu0 0.0
    %145 = vmatprep.subr.mxu0 0.0
    %146 = vmatpush1.msra.mxu0 0.0
    %147 = vmatprep.subr.mxu0 0.0
    %148 = vmatpush1.msra.mxu0 0.0
    %149 = vmatprep.subr.mxu0 0.0
    %150 = vmatpush1.msra.mxu0 0.0
    %151 = vmatprep.subr.mxu0 0.0
    %152 = vmatpush1.msra.mxu0 0.0
    %153 = vmatprep.mubr.f32.mxu0 0.0
    %154 = vmatmul.mubr.f32.gmra.mrb[0].mxu0 %v38
    %v155 = vpop.f32.mrb[0].mxu0
    %v156 = vadd.f32 0.0, %v155
    %v157 = vpop.f32.mrb[0].mxu0
    %158 = vmatprep.mubr.f32.mxu0 0.0
    %159 = vmatmul.mubr.f32.gmra.mrb[0].mxu0 %v41
    %v160 = vpop.f32.mrb[0].mxu0
    %v161 = vadd.f32 0.0, %v160
    %v162 = vpop.f32.mrb[0].mxu0
    %163 = vmatprep.mubr.f32.mxu0 0.0
    %164 = vmatmul.mubr.f32.gmra.mrb[0].mxu0 %v44
    %v165 = vpop.f32.mrb[0].mxu0
    %v166 = vadd.f32 0.0, %v165
    %v167 = vpop.f32.mrb[0].mxu0
    %168 = vmatprep.mubr.f32.mxu0 0.0
    %169 = vmatmul.mubr.f32.gmra.mrb[0].mxu0 %v47
    %v170 = vpop.f32.mrb[0].mxu0
    %v171 = vadd.f32 0.0, %v170
    %v172 = vpop.f32.mrb[0].mxu0
    %173 = vmatprep.mubr.f32.mxu0 0.0
    %174 = vmatmul.mubr.f32.gmra.mrb[0].mxu0 %v50
    %v175 = vpop.f32.mrb[0].mxu0
    %v176 = vadd.f32 0.0, %v175
    %v177 = vpop.f32.mrb[0].mxu0
    %178 = vmatprep.mubr.f32.mxu0 0.0
    %179 = vmatmul.mubr.f32.gmra.mrb[0].mxu0 %v53
    %v180 = vpop.f32.mrb[0].mxu0
    %v181 = vadd.f32 0.0, %v180
    %v182 = vpop.f32.mrb[0].mxu0
    %183 = vmatprep.mubr.f32.mxu0 0.0
    %184 = vmatmul.mubr.f32.gmra.mrb[0].mxu0 %v56
    %v185 = vpop.f32.mrb[0].mxu0
    %v186 = vadd.f32 0.0, %v185
    %v187 = vpop.f32.mrb[0].mxu0
    %188 = vmatprep.mubr.f32.mxu0 0.0
    %189 = vmatmul.mubr.f32.gmra.mrb[0].mxu0 %v59
    %v190 = vpop.f32.mrb[0].mxu0
    %v191 = vadd.f32 0.0, %v190
    %v192 = vpop.f32.mrb[0].mxu0
    %193 = vmatprep.mubr.f32.mxu0 0.0
    %194 = vmatmul.mubr.f32.gmra.mrb[0].mxu0 %v62
    %v195 = vpop.f32.mrb[0].mxu0
    %v196 = vadd.f32 0.0, %v195
    %v197 = vpop.f32.mrb[0].mxu0
    %198 = vmatprep.mubr.f32.mxu0 0.0
    %199 = vmatmul.mubr.f32.gmra.mrb[0].mxu0 %v65
    %v200 = vpop.f32.mrb[0].mxu0
    %v201 = vadd.f32 0.0, %v200
    %v202 = vpop.f32.mrb[0].mxu0
    %203 = vmatprep.mubr.f32.mxu0 0.0
    %204 = vmatmul.mubr.f32.gmra.mrb[0].mxu0 %v68
    %v205 = vpop.f32.mrb[0].mxu0
    %v206 = vadd.f32 0.0, %v205
    %v207 = vpop.f32.mrb[0].mxu0
    %208 = vmatprep.mubr.f32.mxu0 0.0
    %209 = vmatmul.mubr.f32.gmra.mrb[0].mxu0 %v71
    %v210 = vpop.f32.mrb[0].mxu0
    %v211 = vadd.f32 0.0, %v210
    %v212 = vpop.f32.mrb[0].mxu0
    %213 = vmatprep.mubr.f32.mxu0 0.0
    %214 = vmatmul.mubr.f32.gmra.mrb[0].mxu0 %v74
    %v215 = vpop.f32.mrb[0].mxu0
    %v216 = vadd.f32 0.0, %v215
    %v217 = vpop.f32.mrb[0].mxu0
    %218 = vmatprep.mubr.f32.mxu0 0.0
    %219 = vmatmul.mubr.f32.gmra.mrb[0].mxu0 %v77
    %v220 = vpop.f32.mrb[0].mxu0
    %v221 = vadd.f32 0.0, %v220
    %v222 = vpop.f32.mrb[0].mxu0
    %223 = vmatprep.mubr.f32.mxu0 0.0
    %224 = vmatmul.mubr.f32.gmra.mrb[0].mxu0 %v80
    %v225 = vpop.f32.mrb[0].mxu0
    %v226 = vadd.f32 0.0, %v225
    %v227 = vpop.f32.mrb[0].mxu0
    %228 = vmatprep.mubr.f32.mxu0 0.0
    %229 = vmatmul.mubr.f32.gmra.mrb[0].mxu0 %v83
    %v230 = vpop.f32.mrb[0].mxu0
    %v231 = vadd.f32 0.0, %v230
    %v232 = vpop.f32.mrb[0].mxu0
    %233 = vdwg.mxu0
    %234 = vst [vmem:[#allocation2] sm:$0xff] %v156
    %235 = vst [vmem:[#allocation2 + $0x8] sm:$0xff] %v161
    %236 = vst [vmem:[#allocation2 + $0x10] sm:$0xff] %v166
    %237 = vst [vmem:[#allocation2 + $0x18] sm:$0xff] %v171
    %238 = vst [vmem:[#allocation2 + $0x20] sm:$0xff] %v176
    %239 = vst [vmem:[#allocation2 + $0x28] sm:$0xff] %v181
    %240 = vst [vmem:[#allocation2 + $0x30] sm:$0xff] %v186
    %241 = vst [vmem:[#allocation2 + $0x38] sm:$0xff] %v191
    %242 = vst [vmem:[#allocation2 + $0x40] sm:$0xff] %v196
    %243 = vst [vmem:[#allocation2 + $0x48] sm:$0xff] %v201
    %244 = vst [vmem:[#allocation2 + $0x50] sm:$0xff] %v206
    %245 = vst [vmem:[#allocation2 + $0x58] sm:$0xff] %v211
    %246 = vst [vmem:[#allocation2 + $0x60] sm:$0xff] %v216
    %247 = vst [vmem:[#allocation2 + $0x68] sm:$0xff] %v221
    %248 = vst [vmem:[#allocation2 + $0x70] sm:$0xff] %v226
    %249 = vst [vmem:[#allocation2 + $0x78] sm:$0xff] %v231
    %v250 = vld [vmem:[%s2] sm:$0xff]
    %v251 = vld [vmem:[%s2 + $0x8] sm:$0xff]
    %v252 = vld [vmem:[%s2 + $0x10] sm:$0xff]
    %v253 = vld [vmem:[%s2 + $0x18] sm:$0xff]
    %v254 = vld [vmem:[%s2 + $0x20] sm:$0xff]
    %v255 = vld [vmem:[%s2 + $0x28] sm:$0xff]
    %v256 = vld [vmem:[%s2 + $0x30] sm:$0xff]
    %v257 = vld [vmem:[%s2 + $0x38] sm:$0xff]
    %v258 = vld [vmem:[%s2 + $0x40] sm:$0xff]
    %v259 = vld [vmem:[%s2 + $0x48] sm:$0xff]
    %v260 = vld [vmem:[%s2 + $0x50] sm:$0xff]
    %v261 = vld [vmem:[%s2 + $0x58] sm:$0xff]
    %v262 = vld [vmem:[%s2 + $0x60] sm:$0xff]
    %v263 = vld [vmem:[%s2 + $0x68] sm:$0xff]
    %v264 = vld [vmem:[%s2 + $0x70] sm:$0xff]
    %v265 = vld [vmem:[%s2 + $0x78] sm:$0xff]
    %266 = vmatprep.subr.mxu0 0.0
    %267 = vmatpush1.msra.mxu0 %v250
    %268 = vmatprep.subr.mxu0 0.0
    %269 = vmatpush1.msra.mxu0 %v251
    %270 = vmatprep.subr.mxu0 0.0
    %271 = vmatpush1.msra.mxu0 %v252
    %272 = vmatprep.subr.mxu0 0.0
    %273 = vmatpush1.msra.mxu0 %v253
    %274 = vmatprep.subr.mxu0 0.0
    %275 = vmatpush1.msra.mxu0 %v254
    %276 = vmatprep.subr.mxu0 0.0
    %277 = vmatpush1.msra.mxu0 %v255
    %278 = vmatprep.subr.mxu0 0.0
    %279 = vmatpush1.msra.mxu0 %v256
    %280 = vmatprep.subr.mxu0 0.0
    %281 = vmatpush1.msra.mxu0 %v257
    %282 = vmatprep.subr.mxu0 0.0
    %283 = vmatpush1.msra.mxu0 %v258
    %284 = vmatprep.subr.mxu0 0.0
    %285 = vmatpush1.msra.mxu0 %v259
    %286 = vmatprep.subr.mxu0 0.0
    %287 = vmatpush1.msra.mxu0 %v260
    %288 = vmatprep.subr.mxu0 0.0
    %289 = vmatpush1.msra.mxu0 %v261
    %290 = vmatprep.subr.mxu0 0.0
    %291 = vmatpush1.msra.mxu0 %v262
    %292 = vmatprep.subr.mxu0 0.0
    %293 = vmatpush1.msra.mxu0 %v263
    %294 = vmatprep.subr.mxu0 0.0
    %295 = vmatpush1.msra.mxu0 %v264
    %296 = vmatprep.subr.mxu0 0.0
    %297 = vmatpush1.msra.mxu0 %v265
    %298 = vmatprep.subr.mxu0 0.0
    %299 = vmatpush1.msra.mxu0 0.0
    %300 = vmatprep.subr.mxu0 0.0
    %301 = vmatpush1.msra.mxu0 0.0
    %302 = vmatprep.subr.mxu0 0.0
    %303 = vmatpush1.msra.mxu0 0.0
    %304 = vmatprep.subr.mxu0 0.0
    %305 = vmatpush1.msra.mxu0 0.0
    %306 = vmatprep.subr.mxu0 0.0
    %307 = vmatpush1.msra.mxu0 0.0
    %308 = vmatprep.subr.mxu0 0.0
    %309 = vmatpush1.msra.mxu0 0.0
    %310 = vmatprep.subr.mxu0 0.0
    %311 = vmatpush1.msra.mxu0 0.0
    %312 = vmatprep.subr.mxu0 0.0
    %313 = vmatpush1.msra.mxu0 0.0
    %314 = vmatprep.subr.mxu0 0.0
    %315 = vmatpush1.msra.mxu0 0.0
    %316 = vmatprep.subr.mxu0 0.0
    %317 = vmatpush1.msra.mxu0 0.0
    %318 = vmatprep.subr.mxu0 0.0
    %319 = vmatpush1.msra.mxu0 0.0
    %320 = vmatprep.subr.mxu0 0.0
    %321 = vmatpush1.msra.mxu0 0.0
    %322 = vmatprep.subr.mxu0 0.0
    %323 = vmatpush1.msra.mxu0 0.0
    %324 = vmatprep.subr.mxu0 0.0
    %325 = vmatpush1.msra.mxu0 0.0
    %326 = vmatprep.subr.mxu0 0.0
    %327 = vmatpush1.msra.mxu0 0.0
    %328 = vmatprep.subr.mxu0 0.0
    %329 = vmatpush1.msra.mxu0 0.0
    %330 = vmatprep.mubr.f32.mxu0 0.0
    %331 = vmatmul.mubr.f32.gmra.mrb[0].mxu0 %v156
    %v332 = vpop.f32.mrb[0].mxu0
    %v333 = vadd.f32 0.0, %v332
    %v334 = vpop.f32.mrb[0].mxu0
    %335 = vmatprep.mubr.f32.mxu0 0.0
    %336 = vmatmul.mubr.f32.gmra.mrb[0].mxu0 %v161
    %v337 = vpop.f32.mrb[0].mxu0
    %v338 = vadd.f32 0.0, %v337
    %v339 = vpop.f32.mrb[0].mxu0
    %340 = vmatprep.mubr.f32.mxu0 0.0
    %341 = vmatmul.mubr.f32.gmra.mrb[0].mxu0 %v166
    %v342 = vpop.f32.mrb[0].mxu0
    %v343 = vadd.f32 0.0, %v342
    %v344 = vpop.f32.mrb[0].mxu0
    %345 = vmatprep.mubr.f32.mxu0 0.0
    %346 = vmatmul.mubr.f32.gmra.mrb[0].mxu0 %v171
    %v347 = vpop.f32.mrb[0].mxu0
    %v348 = vadd.f32 0.0, %v347
    %v349 = vpop.f32.mrb[0].mxu0
    %350 = vmatprep.mubr.f32.mxu0 0.0
    %351 = vmatmul.mubr.f32.gmra.mrb[0].mxu0 %v176
    %v352 = vpop.f32.mrb[0].mxu0
    %v353 = vadd.f32 0.0, %v352
    %v354 = vpop.f32.mrb[0].mxu0
    %355 = vmatprep.mubr.f32.mxu0 0.0
    %356 = vmatmul.mubr.f32.gmra.mrb[0].mxu0 %v181
    %v357 = vpop.f32.mrb[0].mxu0
    %v358 = vadd.f32 0.0, %v357
    %v359 = vpop.f32.mrb[0].mxu0
    %360 = vmatprep.mubr.f32.mxu0 0.0
    %361 = vmatmul.mubr.f32.gmra.mrb[0].mxu0 %v186
    %v362 = vpop.f32.mrb[0].mxu0
    %v363 = vadd.f32 0.0, %v362
    %v364 = vpop.f32.mrb[0].mxu0
    %365 = vmatprep.mubr.f32.mxu0 0.0
    %366 = vmatmul.mubr.f32.gmra.mrb[0].mxu0 %v191
    %v367 = vpop.f32.mrb[0].mxu0
    %v368 = vadd.f32 0.0, %v367
    %v369 = vpop.f32.mrb[0].mxu0
    %370 = vmatprep.mubr.f32.mxu0 0.0
    %371 = vmatmul.mubr.f32.gmra.mrb[0].mxu0 %v196
    %v372 = vpop.f32.mrb[0].mxu0
    %v373 = vadd.f32 0.0, %v372
    %v374 = vpop.f32.mrb[0].mxu0
    %375 = vmatprep.mubr.f32.mxu0 0.0
    %376 = vmatmul.mubr.f32.gmra.mrb[0].mxu0 %v201
    %v377 = vpop.f32.mrb[0].mxu0
    %v378 = vadd.f32 0.0, %v377
    %v379 = vpop.f32.mrb[0].mxu0
    %380 = vmatprep.mubr.f32.mxu0 0.0
    %381 = vmatmul.mubr.f32.gmra.mrb[0].mxu0 %v206
    %v382 = vpop.f32.mrb[0].mxu0
    %v383 = vadd.f32 0.0, %v382
    %v384 = vpop.f32.mrb[0].mxu0
    %385 = vmatprep.mubr.f32.mxu0 0.0
    %386 = vmatmul.mubr.f32.gmra.mrb[0].mxu0 %v211
    %v387 = vpop.f32.mrb[0].mxu0
    %v388 = vadd.f32 0.0, %v387
    %v389 = vpop.f32.mrb[0].mxu0
    %390 = vmatprep.mubr.f32.mxu0 0.0
    %391 = vmatmul.mubr.f32.gmra.mrb[0].mxu0 %v216
    %v392 = vpop.f32.mrb[0].mxu0
    %v393 = vadd.f32 0.0, %v392
    %v394 = vpop.f32.mrb[0].mxu0
    %395 = vmatprep.mubr.f32.mxu0 0.0
    %396 = vmatmul.mubr.f32.gmra.mrb[0].mxu0 %v221
    %v397 = vpop.f32.mrb[0].mxu0
    %v398 = vadd.f32 0.0, %v397
    %v399 = vpop.f32.mrb[0].mxu0
    %400 = vmatprep.mubr.f32.mxu0 0.0
    %401 = vmatmul.mubr.f32.gmra.mrb[0].mxu0 %v226
    %v402 = vpop.f32.mrb[0].mxu0
    %v403 = vadd.f32 0.0, %v402
    %v404 = vpop.f32.mrb[0].mxu0
    %405 = vmatprep.mubr.f32.mxu0 0.0
    %406 = vmatmul.mubr.f32.gmra.mrb[0].mxu0 %v231
    %v407 = vpop.f32.mrb[0].mxu0
    %v408 = vadd.f32 0.0, %v407
    %v409 = vpop.f32.mrb[0].mxu0
    %410 = vdwg.mxu0
    %vm411 = vcmask 15360
    %412 = vst.msk [vmem:[%s4] sm:$0xff] %vm411, %v333
    %413 = vst.msk [vmem:[%s4 + $0x8] sm:$0xff] %vm411, %v338
    %414 = vst.msk [vmem:[%s4 + $0x10] sm:$0xff] %vm411, %v343
    %415 = vst.msk [vmem:[%s4 + $0x18] sm:$0xff] %vm411, %v348
    %416 = vst.msk [vmem:[%s4 + $0x20] sm:$0xff] %vm411, %v353
    %417 = vst.msk [vmem:[%s4 + $0x28] sm:$0xff] %vm411, %v358
    %418 = vst.msk [vmem:[%s4 + $0x30] sm:$0xff] %vm411, %v363
    %419 = vst.msk [vmem:[%s4 + $0x38] sm:$0xff] %vm411, %v368
    %420 = vst.msk [vmem:[%s4 + $0x40] sm:$0xff] %vm411, %v373
    %421 = vst.msk [vmem:[%s4 + $0x48] sm:$0xff] %vm411, %v378
    %422 = vst.msk [vmem:[%s4 + $0x50] sm:$0xff] %vm411, %v383
    %423 = vst.msk [vmem:[%s4 + $0x58] sm:$0xff] %vm411, %v388
    %424 = vst.msk [vmem:[%s4 + $0x60] sm:$0xff] %vm411, %v393
    %425 = vst.msk [vmem:[%s4 + $0x68] sm:$0xff] %vm411, %v398
    %426 = vst.msk [vmem:[%s4 + $0x70] sm:$0xff] %vm411, %v403
    %427 = vst.msk [vmem:[%s4 + $0x78] sm:$0xff] %vm411, %v408
    // Predicated region
    $region14: #{tpu_custom_call.1} parent=1 // pred_check
      _
    $region15: #{tpu_custom_call.1} parent=1 // pred_check_branch
      %429 = sbr.rel (0) target = $region17
    $region16: #{tpu_custom_call.1} parent=1 // pred_region
      %s431 = ssub.s32 2048, 2048
      %432 = vsyncadd [#allocation3], %s431
      %s433 = sshll.u32 [#allocation2], 4
      %s434 = int_to_ptr.vmem [resolvable:$true] %s433
      %439 = dma.vmem_to_hbm [thread:$0]  %s434, 2048, %s3, [#allocation3], 128, 128, 8
    $region17: #{tpu_custom_call.1} parent=1 // pred_fallthru
      _
    // Predicated region
    $region18: #{tpu_custom_call.1} parent=1 // pred_check
      _
    $region19: #{tpu_custom_call.1} parent=1 // pred_check_branch
      %441 = sbr.rel (0) target = $region21
    $region20: #{tpu_custom_call.1} parent=1 // pred_region
      _
    $region21: #{tpu_custom_call.1} parent=1 // pred_fallthru
      _
    // Predicated region
    $region22: #{tpu_custom_call.1} parent=1 // pred_check
      _
    $region23: #{tpu_custom_call.1} parent=1 // pred_check_branch
      %443 = sbr.rel (0) target = $region25
    $region24: #{tpu_custom_call.1} parent=1 // pred_region
      %444 = dma.done [#allocation3], 2048
    $region25: #{tpu_custom_call.1} parent=1 // pred_fallthru
      _
    // Predicated region
    $region26: #{tpu_custom_call.1} parent=1 // pred_check
      _
    $region27: #{tpu_custom_call.1} parent=1 // pred_check_branch
      %446 = sbr.rel (0) target = $region29
    $region28: #{tpu_custom_call.1} parent=1 // pred_region
      _
    $region29: #{tpu_custom_call.1} parent=1 // pred_fallthru
      _
    %447 = vsyncpa [#allocation3], 1

</llo_original>
